<compile_context>
chip_gen: v7x
topology: tpu7x:2x2x1
jax: 0.10.0
libtpu: 0.0.40
codegen_flags: <defaults>
</compile_context>

<pallas_src>
import math

import jax
import jax.numpy as jnp
import numpy as np
from jax import lax
from jax.experimental import pallas as pl
from jax.experimental.pallas import tpu as pltpu

X0_EXP = 4.0                  # exp_act clamp point
X0_LOG = 0.005                # log_act clamp point
EXP_X0 = math.exp(X0_EXP)     # torch.where else-branch constants
LOG_X0 = math.log(X0_LOG)
LANES = 128
ROW_MULT = 48                 # lcm(16, 3): bf16 sublane tile x feature period


def _math_act_kernel(x_ref, o_ref):
    # x_ref / o_ref: (TR, 128) lane-dense view of the row-major flattened
    # (..., 3) tensor, in the original HBM dtype.
    x = x_ref[...].astype(jnp.float32)

    # Feature index in the original (..., 3) layout.  Flat index of element
    # (r, l) in this block is (block_row_off + r)*128 + l with
    # block_row_off % 3 == 0 (tr is a multiple of 3), so
    #   col = (128*r + l) % 3 = (2*r + l) % 3
    r = lax.broadcasted_iota(jnp.int32, x.shape, 0)
    l = lax.broadcasted_iota(jnp.int32, x.shape, 1)
    col = (2 * r + l) % 3

    # Clamp inside the transcendental (keeps the argument finite), then select
    # with the torch.where semantics (NaN / clamped inputs -> constant).
    exp_v = jnp.exp(jnp.minimum(x, X0_EXP))
    log_v = jnp.log(jnp.maximum(x, X0_LOG))
    y1 = jnp.where(x < X0_EXP, exp_v, EXP_X0)
    y2 = jnp.where(x > X0_LOG, log_v, LOG_X0)

    out = jnp.where(col == 0, x, jnp.where(col == 1, y1, y2))
    o_ref[...] = out.astype(o_ref.dtype)


def _act_tail(flat_tail, start, dtype):
    """Plain-jnp handling of the (<128-element) unaligned tail."""
    xf = flat_tail.astype(jnp.float32)
    col = jnp.asarray(np.arange(start, start + flat_tail.shape[0]) % 3, jnp.int32)
    y1 = jnp.where(xf < X0_EXP, jnp.exp(jnp.minimum(xf, X0_EXP)), EXP_X0)
    y2 = jnp.where(xf > X0_LOG, jnp.log(jnp.maximum(xf, X0_LOG)), LOG_X0)
    out = jnp.where(col == 0, xf, jnp.where(col == 1, y1, y2))
    return out.astype(dtype)


def math_act_nos(x, *, tile_rows=6144):
    """Forward of math_actNoS for x of shape (..., 3)."""
    assert x.shape[-1] == 3
    orig_shape = x.shape
    dtype = x.dtype

    flat = x.reshape(-1)                      # row-major: feature = flat index % 3
    total = flat.shape[0]                     # 3 * N
    aligned = (total // LANES) * LANES        # largest 128-multiple prefix
    rows = aligned // LANES

    main2d = None
    if rows > 0:
        x2d = (flat if aligned == total else flat[:aligned]).reshape(rows, LANES)

        # Row tile: multiple of 48; capped so v7x megacore sees >= 2 grid steps
        # whenever there is enough work for two blocks.
        tr = max(ROW_MULT, (min(tile_rows, rows) // ROW_MULT) * ROW_MULT)
        half = ((rows // 2) // ROW_MULT) * ROW_MULT
        if half >= ROW_MULT:
            tr = min(tr, half)
        grid = (pl.cdiv(rows, tr),)

        main2d = pl.pallas_call(
            _math_act_kernel,
            out_shape=jax.ShapeDtypeStruct((rows, LANES), dtype),
            grid_spec=pltpu.PrefetchScalarGridSpec(
                num_scalar_prefetch=0,
                grid=grid,
                in_specs=[pl.BlockSpec((tr, LANES), lambda i: (i, 0))],
                out_specs=pl.BlockSpec((tr, LANES), lambda i: (i, 0)),
            ),
            compiler_params=pltpu.CompilerParams(
                dimension_semantics=("parallel",),
                vmem_limit_bytes=32 * 1024 * 1024,
            ),
        )(x2d)

    if aligned == total:
        return main2d.reshape(orig_shape)

    tail_out = _act_tail(flat[aligned:], aligned, dtype)
    if rows == 0:
        return tail_out.reshape(orig_shape)
    return jnp.concatenate([main2d.reshape(-1), tail_out]).reshape(orig_shape)


def _reference(x):
    xf = x.astype(jnp.float32)
    x0, x1, x2 = xf[..., 0:1], xf[..., 1:2], xf[..., 2:3]
    y1 = jnp.where(x1 < X0_EXP, jnp.exp(jnp.minimum(x1, X0_EXP)), EXP_X0)
    y2 = jnp.where(x2 > X0_LOG, jnp.log(jnp.maximum(x2, X0_LOG)), LOG_X0)
    return jnp.concatenate([x0, y1, y2], axis=-1).astype(x.dtype)


if __name__ == "__main__":
    key = jax.random.PRNGKey(0)
    k1, k2, k3 = jax.random.split(key, 3)
    fn = jax.jit(math_act_nos)

    # 1) Aligned fast path (3*N % 128 == 0): zero wrapper copies, 2-step grid.
    x_a = 3.0 * jax.random.normal(k1, (4096, 3), dtype=jnp.float32)
    out_a = fn(x_a)
    jax.block_until_ready(out_a)
    assert out_a.shape == x_a.shape
    assert bool(jnp.allclose(out_a, _reference(x_a), atol=1e-5, rtol=1e-5)), \
        "mismatch vs reference (aligned)"

    # 2) Ragged path: kernel on the 128-aligned prefix (ragged last row block)
    #    + <128-element jnp tail.
    x_b = 3.0 * jax.random.normal(k2, (4000, 3), dtype=jnp.float32)
    out_b = fn(x_b)
    jax.block_until_ready(out_b)
    assert bool(jnp.allclose(out_b, _reference(x_b), atol=1e-5, rtol=1e-5)), \
        "mismatch vs reference (ragged)"

    # 3) bf16 I/O stays bf16 through HBM; upcast to f32 happens in-kernel.
    x_c = (3.0 * jax.random.normal(k3, (4096, 3), dtype=jnp.float32)).astype(jnp.bfloat16)
    out_c = fn(x_c)
    jax.block_until_ready(out_c)
    assert out_c.dtype == jnp.bfloat16
    assert bool(jnp.allclose(out_c.astype(jnp.float32),
                             _reference(x_c).astype(jnp.float32),
                             atol=2e-2, rtol=2e-2)), "mismatch vs reference (bf16)"

    print("KERNEL_OK")
</pallas_src>

<mosaic_0001>
module attributes {stable_mosaic.version = 11 : i64} {
  func.func @_math_act_kernel(%arg0: i32, %arg1: memref<48x128xf32, #tpu.memory_space<vmem>>, %arg2: memref<48x128xf32, #tpu.memory_space<vmem>>) attributes {dimension_semantics = [#tpu.dimension_semantics<parallel>], iteration_bounds = array<i64: 2>, scalar_prefetch = 0 : i64, scratch_operands = 0 : i64, tpu.core_type = #tpu.core_type<tc>, window_params = [{transform_indices = @transform_0, window_bounds = array<i64: 48, 128>}, {transform_indices = @transform_1, window_bounds = array<i64: 48, 128>}]} {
    %c0 = arith.constant 0 : index
    %c0_0 = arith.constant 0 : index
    %0 = vector.load %arg1[%c0, %c0_0] : memref<48x128xf32, #tpu.memory_space<vmem>>, vector<48x128xf32>
    %1 = tpu.iota {dimensions = array<i32: 0>} : vector<48x128xi32>
    %2 = tpu.iota {dimensions = array<i32: 1>} : vector<48x128xi32>
    %c2_i32 = arith.constant 2 : i32
    %3 = vector.broadcast %c2_i32 : i32 to vector<48x128xi32>
    %4 = arith.muli %3, %1 : vector<48x128xi32>
    %5 = arith.addi %4, %2 : vector<48x128xi32>
    %c3_i32 = arith.constant 3 : i32
    %c0_i32 = arith.constant 0 : i32
    %6 = arith.cmpi eq, %c3_i32, %c0_i32 : i32
    %c1_i32 = arith.constant 1 : i32
    %7 = arith.select %6, %c1_i32, %c3_i32 : i32
    %8 = vector.broadcast %7 : i32 to vector<48x128xi32>
    %9 = arith.remsi %5, %8 : vector<48x128xi32>
    %c0_i32_1 = arith.constant 0 : i32
    %10 = vector.broadcast %c0_i32_1 : i32 to vector<48x128xi32>
    %11 = arith.cmpi ne, %9, %10 : vector<48x128xi32>
    %c0_i32_2 = arith.constant 0 : i32
    %12 = vector.broadcast %c0_i32_2 : i32 to vector<48x128xi32>
    %13 = arith.cmpi slt, %9, %12 : vector<48x128xi32>
    %c0_i32_3 = arith.constant 0 : i32
    %14 = arith.cmpi slt, %7, %c0_i32_3 : i32
    %15 = vector.broadcast %14 : i1 to vector<48x128xi1>
    %16 = vector.broadcast %15 : vector<48x128xi1> to vector<48x128xi1>
    %17 = arith.xori %13, %16 : vector<48x128xi1>
    %18 = arith.andi %17, %11 : vector<48x128xi1>
    %19 = vector.broadcast %7 : i32 to vector<48x128xi32>
    %20 = arith.addi %9, %19 : vector<48x128xi32>
    %21 = arith.select %18, %20, %9 : vector<48x128xi1>, vector<48x128xi32>
    %cst = arith.constant 4.000000e+00 : f32
    %22 = vector.broadcast %cst : f32 to vector<48x128xf32>
    %23 = arith.minimumf %0, %22 : vector<48x128xf32>
    %24 = math.exp %23 : vector<48x128xf32>
    %cst_4 = arith.constant 5.000000e-03 : f32
    %25 = vector.broadcast %cst_4 : f32 to vector<48x128xf32>
    %26 = arith.maximumf %0, %25 : vector<48x128xf32>
    %27 = math.log %26 : vector<48x128xf32>
    %cst_5 = arith.constant 4.000000e+00 : f32
    %28 = vector.broadcast %cst_5 : f32 to vector<48x128xf32>
    %29 = arith.cmpf olt, %0, %28 : vector<48x128xf32>
    %cst_6 = arith.constant 54.5981483 : f32
    %30 = vector.broadcast %cst_6 : f32 to vector<48x128xf32>
    %31 = arith.select %29, %24, %30 : vector<48x128xi1>, vector<48x128xf32>
    %cst_7 = arith.constant 5.000000e-03 : f32
    %32 = vector.broadcast %cst_7 : f32 to vector<48x128xf32>
    %33 = arith.cmpf ogt, %0, %32 : vector<48x128xf32>
    %cst_8 = arith.constant -5.29831743 : f32
    %34 = vector.broadcast %cst_8 : f32 to vector<48x128xf32>
    %35 = arith.select %33, %27, %34 : vector<48x128xi1>, vector<48x128xf32>
    %c0_i32_9 = arith.constant 0 : i32
    %36 = vector.broadcast %c0_i32_9 : i32 to vector<48x128xi32>
    %37 = arith.cmpi eq, %21, %36 : vector<48x128xi32>
    %c1_i32_10 = arith.constant 1 : i32
    %38 = vector.broadcast %c1_i32_10 : i32 to vector<48x128xi32>
    %39 = arith.cmpi eq, %21, %38 : vector<48x128xi32>
    %40 = arith.select %39, %31, %35 : vector<48x128xi1>, vector<48x128xf32>
    %41 = arith.select %37, %0, %40 : vector<48x128xi1>, vector<48x128xf32>
    %c0_11 = arith.constant 0 : index
    %c0_12 = arith.constant 0 : index
    %42 = vector.load %arg2[%c0_11, %c0_12] : memref<48x128xf32, #tpu.memory_space<vmem>>, vector<48x128xf32>
    tpu.vector_store %arg2[%c0_11, %c0_12], %41 {strides = array<i32>} : memref<48x128xf32, #tpu.memory_space<vmem>>, vector<48x128xf32>,
    return
  }
  func.func @transform_0(%arg0: i32) -> (i32, i32) {
    %c0_i32 = arith.constant 0 : i32
    %c0_i32_0 = arith.constant 0 : i32
    return %arg0, %c0_i32 : i32, i32
  }
  func.func @transform_1(%arg0: i32) -> (i32, i32) {
    %c0_i32 = arith.constant 0 : i32
    %c0_i32_0 = arith.constant 0 : i32
    return %arg0, %c0_i32 : i32, i32
  }
}

</mosaic_0001>

<llo_original>
// kernel: math_act_nos.1
$region0: #{math_act_nos.1}
  #allocation0 [shape = 'u32[]', space=smem, size = 0x4, offset = 0x4, fixed_abs, tag = 'smem constant byte address 0x4 - core index']
  #allocation1 [shape = 'u32[144,128]{1,0:T(1,128)}', space=vmem, size = 0x12000, scoped, tag = 'internal scratch']
  %s0 = inlined_call_operand.vmem [shape: f32[96,128], index: 0, kind: input, shape index: {}]
  %s1 = inlined_call_operand.vmem [shape: f32[96,128], index: 1, kind: output, shape index: {}]
  %s2 = sld [smem:[#allocation0]]
  $region37: #{math_act_nos.1} parent=0
    _
  %s4 = ssub.s32 1, %s2
  %s5 = scalar_select 0, %s4, %s2
  loop: start=0, step=1, limit=4
  $region2: #{math_act_nos.1} parent=0 // loop_pre_header
    _
  $region3: #{math_act_nos.1} parent=0 // loop_header
    %s7 = sphi 0, %s11
    %p8 = scmp.ge.s32.totalorder %s7, 4
    %s17 = sphi 0, %s19
    %s20 = sphi 0, %s17
    %s21 = sphi 0, %s20
    %s37 = sphi 0, %s21
    %s43 = sphi 0, %s45
    %s46 = sphi 0, %s43
    %s47 = sphi 0, %s46
    %s63 = sphi 0, %s47
  $region4: #{math_act_nos.1} parent=0 // loop_header_branch
    %10 = sbr.rel (%p8) target = $region8
  $region5: #{math_act_nos.1} parent=0 // loop_body
    %s12 = ssub.s32 %s7, 1
    %s13 = ssub.s32 %s7, 2
    %s14 = sadd.s32 %s7, 1
    %s15 = ssub.s32 %s7, %s14
    %p16 = scmp.eq.s32.totalorder %s15, 0
    %s18 = sadd.s32 %s17, 1
    %s19 = scalar_select %p16, %s17, %s18
    %p22 = pneg %p16
    %p23 = scmp.eq.s32.totalorder %s7, 1
    %p24 = por %p22, %p23
    %p25 = scmp.ne.s32.totalorder %s17, %s20
    %p26 = scmp.eq.s32.totalorder %s7, 0
    %p27 = por %p25, %p26
    %p28 = scmp.ne.s32.totalorder %s17, %s20
    %p29 = scmp.eq.s32.totalorder %s12, 1
    %p30 = por %p28, %p29
    %p31 = scmp.ne.s32.totalorder %s20, %s21
    %p32 = scmp.eq.s32.totalorder %s12, 0
    %p33 = por %p31, %p32
    %p34 = scmp.ne.s32.totalorder %s20, %s21
    %p35 = scmp.eq.s32.totalorder %s13, 1
    %p36 = por %p34, %p35
    %p38 = scmp.ne.s32.totalorder %s21, %s37
    %p39 = scmp.eq.s32.totalorder %s13, 0
    %p40 = por %p38, %p39
    %s41 = ssub.s32 %s7, %s14
    %p42 = scmp.eq.s32.totalorder %s41, 0
    %s44 = sadd.s32 %s43, 1
    %s45 = scalar_select %p42, %s43, %s44
    %p48 = pneg %p42
    %p49 = scmp.eq.s32.totalorder %s7, 1
    %p50 = por %p48, %p49
    %p51 = scmp.ne.s32.totalorder %s43, %s46
    %p52 = scmp.eq.s32.totalorder %s7, 0
    %p53 = por %p51, %p52
    %p54 = scmp.ne.s32.totalorder %s43, %s46
    %p55 = scmp.eq.s32.totalorder %s12, 1
    %p56 = por %p54, %p55
    %p57 = scmp.ne.s32.totalorder %s46, %s47
    %p58 = scmp.eq.s32.totalorder %s12, 0
    %p59 = por %p57, %p58
    %p60 = scmp.ne.s32.totalorder %s46, %s47
    %p61 = scmp.eq.s32.totalorder %s13, 1
    %p62 = por %p60, %p61
    %p64 = scmp.ne.s32.totalorder %s47, %s63
    %p65 = scmp.eq.s32.totalorder %s13, 0
    %p66 = por %p64, %p65
    %p67 = scmp.le.s32.totalorder 1, %s7
    %p68 = scmp.lt.s32.totalorder %s7, 3
    %p69 = pnand %p67, %p68
    %p70 = pneg %p69
    // Predicated region
    $region9: #{math_act_nos.1} parent=5 // pred_check
      _
    $region10: #{math_act_nos.1} parent=5 // pred_check_branch
      %72 = sbr.rel (%p69) target = $region12
    $region11: #{math_act_nos.1} parent=5 // pred_region
      %s73 = ssub.s32 %s7, 1
    $region12: #{math_act_nos.1} parent=5 // pred_fallthru
      _
    %p74 = scmp.lt.s32.totalorder %s7, 2
    // Predicated region
    $region13: #{math_act_nos.1} parent=5 // pred_check
      %p75 = pneg %p74
    $region14: #{math_act_nos.1} parent=5 // pred_check_branch
      %77 = sbr.rel (%p75) target = $region16
    $region15: #{math_act_nos.1} parent=5 // pred_region
      // Predicated region
      $region17: #{math_act_nos.1} parent=15 // pred_check
        %p78 = pneg %p27
      $region18: #{math_act_nos.1} parent=15 // pred_check_branch
        %80 = sbr.rel (%p78) target = $region20
      $region19: #{math_act_nos.1} parent=15 // pred_region
        %s81 = smul.u32 6, %s7
        %p82 = scmp.lt.s32.totalorder %s81, 11
        %s83 = scalar_select %p82, %s81, 11
        %s84 = smul.addr %s83, 8
        %s85 = scalar_lea.vmem %s0, %s84
        %s86 = smul.u32 6, %s7
      $region20: #{math_act_nos.1} parent=15 // pred_fallthru
        _
    $region16: #{math_act_nos.1} parent=5 // pred_fallthru
      _
    %p87 = scmp.le.s32.totalorder 1, %s7
    %p88 = scmp.lt.s32.totalorder %s7, 3
    %p89 = pnand %p87, %p88
    %p90 = pneg %p89
    // Predicated region
    $region21: #{math_act_nos.1} parent=5 // pred_check
      _
    $region22: #{math_act_nos.1} parent=5 // pred_check_branch
      %92 = sbr.rel (%p89) target = $region24
    $region23: #{math_act_nos.1} parent=5 // pred_region
      %s93 = ssub.s32 %s7, 1
      %s94 = smul.u32 6, %s12
      %p95 = scmp.lt.s32.totalorder %s94, 11
      %s96 = scalar_select %p95, %s94, 11
      %s97 = smul.addr %s96, 8
      %s98 = scalar_lea.vmem %s0, %s97
      %p99 = pneg %p33
      %p100 = pneg %p30
      %p101 = pneg %p59
      %p102 = pneg %p56
      %s103 = smul.u32 6, %s12
      %p104 = scmp.lt.s32.totalorder %s103, 11
      %s105 = scalar_select %p104, %s103, 11
      %s106 = smul.addr %s105, 8
      %s107 = scalar_lea.vmem %s1, %s106
      %s108 = smul.u32 6, %s12
      %p109 = scmp.lt.s32.totalorder %s108, 11
      %s110 = scalar_select %p109, %s108, 11
      %s111 = smul.addr %s110, 8
      %s112 = scalar_lea.vmem %s0, %s111
      %s113 = smul.u32 6, %s12
      %s114 = smul.u32 6, %s12
      %p115 = scmp.lt.s32.totalorder %s114, 11
      %s116 = scalar_select %p115, %s114, 11
      %s117 = smul.addr %s116, 8
      %s118 = scalar_lea.vmem %s1, %s117
      %s119 = smul.u32 6, %s12
      %v120 = vld [vmem:[%s112] sm:$0xff]
      %v121 = vld [vmem:[%s112 + $0x8] sm:$0xff]
      %v122 = vld [vmem:[%s112 + $0x10] sm:$0xff]
      %v123 = vld [vmem:[%s112 + $0x18] sm:$0xff]
      %v124 = vld [vmem:[%s112 + $0x20] sm:$0xff]
      %v125 = vld [vmem:[%s112 + $0x28] sm:$0xff]
      %v126 = vlaneseq
      %v127 = vshrl.u32 %v126, 7
      %v128 = vadd.s32 %v127, 8
      %v129 = vadd.s32 %v127, 16
      %v130 = vadd.s32 %v127, 24
      %v131 = vadd.s32 %v127, 32
      %v132 = vadd.s32 %v127, 40
      %v133 = vlaneseq
      %v134 = vand.u32 %v133, 127
      %v135 = vmul.u32 %v127, 2
      %v136 = vmul.u32 %v128, 2
      %v137 = vmul.u32 %v129, 2
      %v138 = vmul.u32 %v130, 2
      %v139 = vmul.u32 %v131, 2
      %v140 = vmul.u32 %v132, 2
      %v141 = vadd.s32 %v135, %v134
      %v142 = vadd.s32 %v136, %v134
      %v143 = vadd.s32 %v137, %v134
      %v144 = vadd.s32 %v138, %v134
      %v145 = vadd.s32 %v139, %v134
      %v146 = vadd.s32 %v140, %v134
      %vm147 = vcmp.lt.s32.totalorder %v141, 0
      %v148 = vsub.s32 0, %v141
      %v149 = vsel %vm147, %v148, %v141
      %v150 = vmul.u32.u64.compose %v149, 2863311531
      %v151 = vextract.low.u32 %v150
      %v152 = vextract.high.u32 %v150
      %v153 = vshrl.u32 %v152, 1
      %v154 = vmul.u32 %v153, 3
      %v155 = vsub.s32 %v149, %v154
      %v156 = vsub.s32 0, %v155
      %v157 = vsel %vm147, %v156, %v155
      %vm158 = vcmp.lt.s32.totalorder %v142, 0
      %v159 = vsub.s32 0, %v142
      %v160 = vsel %vm158, %v159, %v142
      %v161 = vmul.u32.u64.compose %v160, 2863311531
      %v162 = vextract.low.u32 %v161
      %v163 = vextract.high.u32 %v161
      %v164 = vshrl.u32 %v163, 1
      %v165 = vmul.u32 %v164, 3
      %v166 = vsub.s32 %v160, %v165
      %v167 = vsub.s32 0, %v166
      %v168 = vsel %vm158, %v167, %v166
      %vm169 = vcmp.lt.s32.totalorder %v143, 0
      %v170 = vsub.s32 0, %v143
      %v171 = vsel %vm169, %v170, %v143
      %v172 = vmul.u32.u64.compose %v171, 2863311531
      %v173 = vextract.low.u32 %v172
      %v174 = vextract.high.u32 %v172
      %v175 = vshrl.u32 %v174, 1
      %v176 = vmul.u32 %v175, 3
      %v177 = vsub.s32 %v171, %v176
      %v178 = vsub.s32 0, %v177
      %v179 = vsel %vm169, %v178, %v177
      %vm180 = vcmp.lt.s32.totalorder %v144, 0
      %v181 = vsub.s32 0, %v144
      %v182 = vsel %vm180, %v181, %v144
      %v183 = vmul.u32.u64.compose %v182, 2863311531
      %v184 = vextract.low.u32 %v183
      %v185 = vextract.high.u32 %v183
      %v186 = vshrl.u32 %v185, 1
      %v187 = vmul.u32 %v186, 3
      %v188 = vsub.s32 %v182, %v187
      %v189 = vsub.s32 0, %v188
      %v190 = vsel %vm180, %v189, %v188
      %vm191 = vcmp.lt.s32.totalorder %v145, 0
      %v192 = vsub.s32 0, %v145
      %v193 = vsel %vm191, %v192, %v145
      %v194 = vmul.u32.u64.compose %v193, 2863311531
      %v195 = vextract.low.u32 %v194
      %v196 = vextract.high.u32 %v194
      %v197 = vshrl.u32 %v196, 1
      %v198 = vmul.u32 %v197, 3
      %v199 = vsub.s32 %v193, %v198
      %v200 = vsub.s32 0, %v199
      %v201 = vsel %vm191, %v200, %v199
      %vm202 = vcmp.lt.s32.totalorder %v146, 0
      %v203 = vsub.s32 0, %v146
      %v204 = vsel %vm202, %v203, %v146
      %v205 = vmul.u32.u64.compose %v204, 2863311531
      %v206 = vextract.low.u32 %v205
      %v207 = vextract.high.u32 %v205
      %v208 = vshrl.u32 %v207, 1
      %v209 = vmul.u32 %v208, 3
      %v210 = vsub.s32 %v204, %v209
      %v211 = vsub.s32 0, %v210
      %v212 = vsel %vm202, %v211, %v210
      %vm213 = vcmp.ne.s32.totalorder %v157, 0
      %vm214 = vcmp.ne.s32.totalorder %v168, 0
      %vm215 = vcmp.ne.s32.totalorder %v179, 0
      %vm216 = vcmp.ne.s32.totalorder %v190, 0
      %vm217 = vcmp.ne.s32.totalorder %v201, 0
      %vm218 = vcmp.ne.s32.totalorder %v212, 0
      %vm219 = vcmp.lt.s32.totalorder %v157, 0
      %vm220 = vcmp.lt.s32.totalorder %v168, 0
      %vm221 = vcmp.lt.s32.totalorder %v179, 0
      %vm222 = vcmp.lt.s32.totalorder %v190, 0
      %vm223 = vcmp.lt.s32.totalorder %v201, 0
      %vm224 = vcmp.lt.s32.totalorder %v212, 0
      %vm225 = vmand %vm219, %vm213
      %vm226 = vmand %vm220, %vm214
      %vm227 = vmand %vm221, %vm215
      %vm228 = vmand %vm222, %vm216
      %vm229 = vmand %vm223, %vm217
      %vm230 = vmand %vm224, %vm218
      %v231 = vadd.s32 %v157, 3
      %v232 = vadd.s32 %v168, 3
      %v233 = vadd.s32 %v179, 3
      %v234 = vadd.s32 %v190, 3
      %v235 = vadd.s32 %v201, 3
      %v236 = vadd.s32 %v212, 3
      %v237 = vsel %vm225, %v231, %v157
      %v238 = vsel %vm226, %v232, %v168
      %v239 = vsel %vm227, %v233, %v179
      %v240 = vsel %vm228, %v234, %v190
      %v241 = vsel %vm229, %v235, %v201
      %v242 = vsel %vm230, %v236, %v212
      %v243 = vmin.f32 %v120, 4.0
      %v244 = vmin.f32 %v121, 4.0
      %v245 = vmin.f32 %v122, 4.0
      %v246 = vmin.f32 %v123, 4.0
      %v247 = vmin.f32 %v124, 4.0
      %v248 = vmin.f32 %v125, 4.0
      %v249 = vmul.f32 %v243, 1.442695
      %v250 = vpow.pop %v249
      %v251 = vmul.f32 %v244, 1.442695
      %v252 = vpow.pop %v251
      %v253 = vmul.f32 %v245, 1.442695
      %v254 = vpow.pop %v253
      %v255 = vmul.f32 %v246, 1.442695
      %v256 = vpow.pop %v255
      %v257 = vmul.f32 %v247, 1.442695
      %v258 = vpow.pop %v257
      %v259 = vmul.f32 %v248, 1.442695
      %v260 = vpow.pop %v259
      %v261 = vmax.f32 %v120, 0.005
      %v262 = vmax.f32 %v121, 0.005
      %v263 = vmax.f32 %v122, 0.005
      %v264 = vmax.f32 %v123, 0.005
      %v265 = vmax.f32 %v124, 0.005
      %v266 = vmax.f32 %v125, 0.005
      %v267 = vlog2.pop %v261
      %v268 = vmul.f32 %v267, 0.6931472
      %v269 = vlog2.pop %v262
      %v270 = vmul.f32 %v269, 0.6931472
      %v271 = vlog2.pop %v263
      %v272 = vmul.f32 %v271, 0.6931472
      %v273 = vlog2.pop %v264
      %v274 = vmul.f32 %v273, 0.6931472
      %v275 = vlog2.pop %v265
      %v276 = vmul.f32 %v275, 0.6931472
      %v277 = vlog2.pop %v266
      %v278 = vmul.f32 %v277, 0.6931472
      %vm279 = vcmp.lt.f32.partialorder %v120, 4.0
      %vm280 = vcmp.lt.f32.partialorder %v121, 4.0
      %vm281 = vcmp.lt.f32.partialorder %v122, 4.0
      %vm282 = vcmp.lt.f32.partialorder %v123, 4.0
      %vm283 = vcmp.lt.f32.partialorder %v124, 4.0
      %vm284 = vcmp.lt.f32.partialorder %v125, 4.0
      %v285 = vsel %vm279, %v250, 54.59815
      %v286 = vsel %vm280, %v252, 54.59815
      %v287 = vsel %vm281, %v254, 54.59815
      %v288 = vsel %vm282, %v256, 54.59815
      %v289 = vsel %vm283, %v258, 54.59815
      %v290 = vsel %vm284, %v260, 54.59815
      %vm291 = vcmp.gt.f32.partialorder %v120, 0.005
      %vm292 = vcmp.gt.f32.partialorder %v121, 0.005
      %vm293 = vcmp.gt.f32.partialorder %v122, 0.005
      %vm294 = vcmp.gt.f32.partialorder %v123, 0.005
      %vm295 = vcmp.gt.f32.partialorder %v124, 0.005
      %vm296 = vcmp.gt.f32.partialorder %v125, 0.005
      %v297 = vsel %vm291, %v268, -5.2983174
      %v298 = vsel %vm292, %v270, -5.2983174
      %v299 = vsel %vm293, %v272, -5.2983174
      %v300 = vsel %vm294, %v274, -5.2983174
      %v301 = vsel %vm295, %v276, -5.2983174
      %v302 = vsel %vm296, %v278, -5.2983174
      %vm303 = vcmp.eq.s32.totalorder %v237, 0
      %vm304 = vcmp.eq.s32.totalorder %v238, 0
      %vm305 = vcmp.eq.s32.totalorder %v239, 0
      %vm306 = vcmp.eq.s32.totalorder %v240, 0
      %vm307 = vcmp.eq.s32.totalorder %v241, 0
      %vm308 = vcmp.eq.s32.totalorder %v242, 0
      %vm309 = vcmp.eq.s32.totalorder %v237, 1
      %vm310 = vcmp.eq.s32.totalorder %v238, 1
      %vm311 = vcmp.eq.s32.totalorder %v239, 1
      %vm312 = vcmp.eq.s32.totalorder %v240, 1
      %vm313 = vcmp.eq.s32.totalorder %v241, 1
      %vm314 = vcmp.eq.s32.totalorder %v242, 1
      %v315 = vsel %vm309, %v285, %v297
      %v316 = vsel %vm310, %v286, %v298
      %v317 = vsel %vm311, %v287, %v299
      %v318 = vsel %vm312, %v288, %v300
      %v319 = vsel %vm313, %v289, %v301
      %v320 = vsel %vm314, %v290, %v302
      %v321 = vsel %vm303, %v120, %v315
      %v322 = vsel %vm304, %v121, %v316
      %v323 = vsel %vm305, %v122, %v317
      %v324 = vsel %vm306, %v123, %v318
      %v325 = vsel %vm307, %v124, %v319
      %v326 = vsel %vm308, %v125, %v320
      %327 = vst [vmem:[%s118] sm:$0xff] %v321
      %328 = vst [vmem:[%s118 + $0x8] sm:$0xff] %v322
      %329 = vst [vmem:[%s118 + $0x10] sm:$0xff] %v323
      %330 = vst [vmem:[%s118 + $0x18] sm:$0xff] %v324
      %331 = vst [vmem:[%s118 + $0x20] sm:$0xff] %v325
      %332 = vst [vmem:[%s118 + $0x28] sm:$0xff] %v326
      %s333 = smul.u32 6, %s12
      %p334 = scmp.lt.s32.totalorder %s333, 11
      %s335 = scalar_select %p334, %s333, 11
      %s336 = smul.addr %s335, 8
      %s337 = scalar_lea.vmem %s1, %s336
      // Predicated region
      $region25: #{math_act_nos.1} parent=23 // pred_check
        %p338 = pneg %p56
      $region26: #{math_act_nos.1} parent=23 // pred_check_branch
        %340 = sbr.rel (%p338) target = $region28
      $region27: #{math_act_nos.1} parent=23 // pred_region
        %s341 = smul.u32 6, %s12
      $region28: #{math_act_nos.1} parent=23 // pred_fallthru
        _
    $region24: #{math_act_nos.1} parent=5 // pred_fallthru
      _
    %p342 = scmp.le.s32.totalorder 2, %s7
    // Predicated region
    $region29: #{math_act_nos.1} parent=5 // pred_check
      %p343 = pneg %p342
    $region30: #{math_act_nos.1} parent=5 // pred_check_branch
      %345 = sbr.rel (%p343) target = $region32
    $region31: #{math_act_nos.1} parent=5 // pred_region
      %s346 = ssub.s32 %s7, 2
      // Predicated region
      $region33: #{math_act_nos.1} parent=31 // pred_check
        %p347 = pneg %p62
      $region34: #{math_act_nos.1} parent=31 // pred_check_branch
        %349 = sbr.rel (%p347) target = $region36
      $region35: #{math_act_nos.1} parent=31 // pred_region
        %s350 = smul.u32 6, %s13
        %p351 = scmp.lt.s32.totalorder %s350, 11
        %s352 = scalar_select %p351, %s350, 11
        %s353 = smul.addr %s352, 8
        %s354 = scalar_lea.vmem %s1, %s353
      $region36: #{math_act_nos.1} parent=31 // pred_fallthru
        _
    $region32: #{math_act_nos.1} parent=5 // pred_fallthru
      _
  $region6: #{math_act_nos.1} parent=0 // loop_footer
    %s11 = sadd.s32 1, %s7
  $region7: #{math_act_nos.1} parent=0 // loop_footer_branch
    %6 = sbr.rel target = $region3
  $region8: #{math_act_nos.1} parent=0 // loop_exit
    _

</llo_original>
